<compile_context>
chip_gen: v5e
topology: v5e:2x2
jax: 0.10.0
libtpu: 0.0.40
codegen_flags: <defaults>
</compile_context>

<pallas_src>
import jax
import jax.numpy as jnp
from jax.experimental import pallas as pl
from jax.experimental.pallas import tpu as pltpu


def _round_up(n, m):
    return ((n + m - 1) // m) * m


def _quad_nomix_kernel(x_ref, w_ref, o_ref):
    """out[b] = sum_d w1[d]^2 * x[b, d]^2 for one batch tile.

    Pure VPU multiply + cross-lane reduce; the head is width-1 so the MXU is
    deliberately avoided (a matmul would burn a full MXU pass for one lane).
    """
    x = x_ref[...]                       # (TB, D)
    w = w_ref[...]                       # (1, D) -> broadcasts over sublanes
    prod = (x * x) * (w * w)
    o_ref[...] = jnp.sum(prod, axis=-1, keepdims=True)


def quad_nomix_forward(input_tensor, w1, *, tile_b=512):
    """Pallas forward of ModelQuadNoMixTorch: (w1 ** 2) @ (input ** 2).

    Mirrors torch semantics:
      * input (D,)    -> 0-d scalar
      * input (D, B)  -> (B,) vector (one value per column / sample)
    """
    w1 = jnp.asarray(w1, jnp.float32)
    x = jnp.asarray(input_tensor, jnp.float32)

    scalar_out = (x.ndim == 1)
    if scalar_out:
        x = x[:, None]                   # (D, 1)

    # layout plumbing outside the kernel: batch on sublanes, features on lanes
    xT = x.T                             # (B, D)
    B, D = xT.shape

    TB = min(tile_b, _round_up(B, 8))    # batch tile, multiple of 8 sublanes
    B_pad = _round_up(B, TB)
    if B_pad != B:
        xT = jnp.pad(xT, ((0, B_pad - B), (0, 0)))

    out = pl.pallas_call(
        _quad_nomix_kernel,
        out_shape=jax.ShapeDtypeStruct((B_pad, 1), jnp.float32),
        grid=(pl.cdiv(B_pad, TB),),
        in_specs=[
            pl.BlockSpec((TB, D), lambda i: (i, 0)),   # streamed batch tile
            pl.BlockSpec((1, D), lambda i: (0, 0)),    # weight row stays resident
        ],
        out_specs=pl.BlockSpec((TB, 1), lambda i: (i, 0)),
        compiler_params=pltpu.CompilerParams(
            dimension_semantics=("parallel",)),        # v7x: 2 TCs split batch
    )(xT, w1.reshape(1, D))

    y = out[:B, 0]
    if scalar_out:
        return y[0]                      # matches torch (D,) @ (D,) -> 0-d scalar
    return y


def reference_forward(input_tensor, w1):
    """Plain-JAX reference: (w1**2) @ (input**2)."""
    x = jnp.asarray(input_tensor, jnp.float32) ** 2
    return (jnp.asarray(w1, jnp.float32) ** 2) @ x


if __name__ == "__main__":
    dim_observation, dim_action = 5, 3
    D = dim_observation + dim_action
    B = 16

    key = jax.random.PRNGKey(0)
    k_w, k_x1, k_xb = jax.random.split(key, 3)

    # torch init is w1 = ones; also test with random "loaded" weights so the
    # check is non-trivial.
    w1 = jax.random.uniform(k_w, (D,), jnp.float32, minval=0.5, maxval=1.5)

    # 1-D observation/action vector -> 0-d scalar (torch: (D,) @ (D,) -> scalar)
    x1 = jax.random.normal(k_x1, (D,), jnp.float32)
    y1 = jax.block_until_ready(quad_nomix_forward(x1, w1))
    assert y1.shape == (), y1.shape
    assert jnp.allclose(y1, reference_forward(x1, w1), atol=1e-5, rtol=1e-5)

    # column-batched input (D, B) -> (B,)
    xb = jax.random.normal(k_xb, (D, B), jnp.float32)
    yb = jax.block_until_ready(quad_nomix_forward(xb, w1))
    assert yb.shape == (B,), yb.shape
    assert jnp.allclose(yb, reference_forward(xb, w1), atol=1e-5, rtol=1e-5)

    # default torch init (w1 = ones): out = sum_d x[d]^2 per column
    y_ones = jax.block_until_ready(
        quad_nomix_forward(xb, jnp.ones((D,), jnp.float32)))
    assert jnp.allclose(y_ones, jnp.sum(xb * xb, axis=0), atol=1e-5, rtol=1e-5)

    print("KERNEL_OK")
</pallas_src>

<mosaic_0001>
module attributes {stable_mosaic.version = 11 : i64} {
  func.func @_quad_nomix_kernel(%arg0: i32, %arg1: memref<8x8xf32, #tpu.memory_space<vmem>>, %arg2: memref<1x8xf32, #tpu.memory_space<vmem>>, %arg3: memref<8x1xf32, #tpu.memory_space<vmem>>) attributes {dimension_semantics = [#tpu.dimension_semantics<parallel>], iteration_bounds = array<i64: 1>, scalar_prefetch = 0 : i64, scratch_operands = 0 : i64, tpu.core_type = #tpu.core_type<tc>, window_params = [{transform_indices = @transform_0, window_bounds = array<i64: 8, 8>}, {pipeline_mode = #tpu.pipeline_mode<synchronous>, transform_indices = @transform_1, window_bounds = array<i64: 1, 8>}, {transform_indices = @transform_2, window_bounds = array<i64: 8, 1>}]} {
    %c0 = arith.constant 0 : index
    %c0_0 = arith.constant 0 : index
    %0 = vector.load %arg1[%c0, %c0_0] : memref<8x8xf32, #tpu.memory_space<vmem>>, vector<8x8xf32>
    %c0_1 = arith.constant 0 : index
    %c0_2 = arith.constant 0 : index
    %1 = vector.load %arg2[%c0_1, %c0_2] : memref<1x8xf32, #tpu.memory_space<vmem>>, vector<1x8xf32>
    %2 = arith.mulf %0, %0 : vector<8x8xf32>
    %3 = arith.mulf %1, %1 : vector<1x8xf32>
    %4 = vector.broadcast %3 : vector<1x8xf32> to vector<8x8xf32>
    %5 = arith.mulf %2, %4 : vector<8x8xf32>
    %cst = arith.constant dense<0.000000e+00> : vector<8xf32>
    %6 = vector.multi_reduction <add>, %5, %cst [1] : vector<8x8xf32> to vector<8xf32>
    %7 = vector.shape_cast %6 : vector<8xf32> to vector<8x1xf32>
    %c0_3 = arith.constant 0 : index
    %c0_4 = arith.constant 0 : index
    %8 = vector.load %arg3[%c0_3, %c0_4] : memref<8x1xf32, #tpu.memory_space<vmem>>, vector<8x1xf32>
    tpu.vector_store %arg3[%c0_3, %c0_4], %7 {strides = array<i32>} : memref<8x1xf32, #tpu.memory_space<vmem>>, vector<8x1xf32>,
    return
  }
  func.func @transform_0(%arg0: i32) -> (i32, i32) {
    %c0_i32 = arith.constant 0 : i32
    %c0_i32_0 = arith.constant 0 : i32
    return %arg0, %c0_i32 : i32, i32
  }
  func.func @transform_1(%arg0: i32) -> (i32, i32) {
    %c0_i32 = arith.constant 0 : i32
    %c0_i32_0 = arith.constant 0 : i32
    %c0_i32_1 = arith.constant 0 : i32
    return %c0_i32, %c0_i32_0 : i32, i32
  }
  func.func @transform_2(%arg0: i32) -> (i32, i32) {
    %c0_i32 = arith.constant 0 : i32
    %c0_i32_0 = arith.constant 0 : i32
    return %arg0, %c0_i32 : i32, i32
  }
}

</mosaic_0001>

<llo_original>
// kernel: tpu_custom_call.1
$region0: #{tpu_custom_call.1}
  #allocation0 [shape = 'u32[]', space=smem, size = 0x4, offset = 0x4, fixed_abs, tag = 'smem constant byte address 0x4 - core index']
  #allocation1 [shape = 'u32[72,128]{1,0:T(1,128)}', space=vmem, size = 0x9000, scoped, tag = 'internal scratch']
  %s0 = inlined_call_operand.hbm [shape: f32[8,8], index: 0, kind: input, shape index: {}]
  %s1 = inlined_call_operand.hbm [shape: f32[1,8], index: 1, kind: input, shape index: {}]
  %s2 = inlined_call_operand.vmem [shape: f32[8,1], index: 2, kind: output, shape index: {}]
  %s3 = sld [smem:[#allocation0]]
  $region26: #{tpu_custom_call.1} parent=0
    _
  %s5 = ssub.s32 1, %s3
  %s6 = scalar_select 0, %s5, %s3
  $region1: #{tpu_custom_call.1} parent=0
    #allocation2 [shape = 'u8[4096]{0}', space=vmem, size = 0x1000, scoped, tag = 'input window, operand 0, single buffered']
    #allocation3 [shape = 's32[1]{0}', space=sflag, size = 0x4, scoped, tag = 'scoped memory for tpu_custom_call.1']
    #allocation4 [shape = 'u8[512]{0}', space=vmem, size = 0x400, scoped, tag = 'input window, operand 1, single buffered']
    #allocation5 [shape = 's32[1]{0}', space=sflag, size = 0x4, scoped, tag = 'scoped memory for tpu_custom_call.1']
    %7 = vsyncpa [#allocation3], 0
    %8 = vsyncpa [#allocation5], 0
    // Predicated region
    $region2: #{tpu_custom_call.1} parent=1 // pred_check
      _
    $region3: #{tpu_custom_call.1} parent=1 // pred_check_branch
      %10 = sbr.rel (0) target = $region5
    $region4: #{tpu_custom_call.1} parent=1 // pred_region
      %12 = vsyncadd [#allocation3], 0
      %s14 = sshll.u32 %s0, 4
      %s15 = int_to_ptr.hbm [resolvable:$true] %s14
      %s16 = sshll.u32 [#allocation2], 4
      %s17 = int_to_ptr.vmem [resolvable:$true] %s16
      %19 = dma.hbm_to_vmem [thread:$0]  %s15, 128, %s17, [#allocation3]
    $region5: #{tpu_custom_call.1} parent=1 // pred_fallthru
      _
    // Predicated region
    $region6: #{tpu_custom_call.1} parent=1 // pred_check
      _
    $region7: #{tpu_custom_call.1} parent=1 // pred_check_branch
      %21 = sbr.rel (0) target = $region9
    $region8: #{tpu_custom_call.1} parent=1 // pred_region
      %23 = vsyncadd [#allocation5], 0
      %s25 = sshll.u32 %s1, 4
      %s26 = int_to_ptr.hbm [resolvable:$true] %s25
      %s27 = sshll.u32 [#allocation4], 4
      %s28 = int_to_ptr.vmem [resolvable:$true] %s27
      %30 = dma.hbm_to_vmem [thread:$0]  %s26, 16, %s28, [#allocation5]
    $region9: #{tpu_custom_call.1} parent=1 // pred_fallthru
      _
    // Predicated region
    $region10: #{tpu_custom_call.1} parent=1 // pred_check
      _
    $region11: #{tpu_custom_call.1} parent=1 // pred_check_branch
      %32 = sbr.rel (0) target = $region13
    $region12: #{tpu_custom_call.1} parent=1 // pred_region
      %34 = dma.done [#allocation3], 128
    $region13: #{tpu_custom_call.1} parent=1 // pred_fallthru
      _
    // Predicated region
    $region14: #{tpu_custom_call.1} parent=1 // pred_check
      _
    $region15: #{tpu_custom_call.1} parent=1 // pred_check_branch
      %36 = sbr.rel (0) target = $region17
    $region16: #{tpu_custom_call.1} parent=1 // pred_region
      %38 = dma.done [#allocation5], 16
    $region17: #{tpu_custom_call.1} parent=1 // pred_fallthru
      _
    %v39 = vld [vmem:[#allocation2] sm:$0xff]
    %v40 = vld [vmem:[#allocation4] sm:$0x1]
    %v41 = vmul.f32 %v39, %v39
    %v42 = vmul.f32 %v40, %v40
    %v44 = vperm.slane %v42, 0
    %v46 = vmul.f32 %v41, %v44
    %vm47 = vcmask 64512
    %v48 = vsel %vm47, %v46, 0.0
    %49 = vadd.xlane.f32.xlu0 %v48
    %v50 = vpop.xlane.xlu0 %49
    %vm51 = vcmask 7168
    %52 = vst.msk [vmem:[%s2] sm:$0xff] %vm51, %v50
    // Predicated region
    $region18: #{tpu_custom_call.1} parent=1 // pred_check
      _
    $region19: #{tpu_custom_call.1} parent=1 // pred_check_branch
      %54 = sbr.rel (0) target = $region21
    $region20: #{tpu_custom_call.1} parent=1 // pred_region
      _
    $region21: #{tpu_custom_call.1} parent=1 // pred_fallthru
      _
    // Predicated region
    $region22: #{tpu_custom_call.1} parent=1 // pred_check
      _
    $region23: #{tpu_custom_call.1} parent=1 // pred_check_branch
      %56 = sbr.rel (0) target = $region25
    $region24: #{tpu_custom_call.1} parent=1 // pred_region
      _
    $region25: #{tpu_custom_call.1} parent=1 // pred_fallthru
      _
    %57 = vsyncpa [#allocation3], 1
    %58 = vsyncpa [#allocation5], 1

</llo_original>
